<compile_context>
chip_gen: v7x
topology: tpu7x:2x2x1
jax: 0.10.0
libtpu: 0.0.40
codegen_flags: <defaults>
</compile_context>

<pallas_src>
import math
import functools

import jax
import jax.numpy as jnp
from jax.experimental import pallas as pl
from jax.experimental.pallas import tpu as pltpu

HM_WEIGHT, WH_WEIGHT, OFF_WEIGHT = 1.0, 0.1, 1.0
NUM_STACKS = 1
_EPS = 1e-4
_LOG_LO = math.log(_EPS)
_LOG_HI = math.log(1.0 - _EPS)


def _pick_tile_pix(n_pix):
    """Largest lane-aligned (multiple of 128) pixel tile, preferring >=2 tiles.

    Kept modest so double-buffered blocks fit v7x's 64 MiB physical VMEM; v5e/
    v6e could use larger tiles, but per-step footprint here is only ~O(100 KB).
    """
    for c in (512, 256, 128):
        if n_pix % c == 0 and n_pix // c >= 2:
            return c
    for c in (512, 256, 128):
        if n_pix % c == 0:
            return c
    return n_pix


# ------------------------------ Pallas kernel -------------------------------

def _fused_model_focal_kernel(C, xcol_ref, w1t_ref, b1t_ref, w2t_ref, b2t_ref,
                              gt_ref, hm_ref, whreg_ref, stats_ref):
    """One grid step = one (image, pixel-tile) pair, channels-first layout.

    Fuses: 3x3 conv (single K=9*Cin MXU dot on im2col'd input) + bias + ReLU,
    the 1x1 head convs (one matmul), and the CenterNet focal-loss partial
    reduction over the heatmap logits while they are still in VMEM.
    All tensors keep pixels on the 128-lane axis (lane-dense loads/stores).
    """
    # ---- conv as one (hidden, 9Cin) x (9Cin, tile_pix) MXU dot --------------
    feats = jnp.dot(w1t_ref[...], xcol_ref[0],
                    preferred_element_type=jnp.float32)          # (hidden, tp)
    feats = jnp.maximum(feats + b1t_ref[...], 0.0)

    # ---- 1x1 head convs: one matmul, bf16 operands, f32 accumulate ----------
    heads = jnp.dot(w2t_ref[...], feats.astype(jnp.bfloat16),
                    preferred_element_type=jnp.float32) + b2t_ref[...]
    hm = heads[:C]                                               # (C, tp) f32
    hm_ref[0] = hm
    whreg_ref[0] = heads[C:]                                     # (4, tp) f32

    # ---- fused CenterNet focal loss (partial sums for this tile) ------------
    gt = gt_ref[0].astype(jnp.float32)                           # (C, tp)
    e = jnp.exp(-jnp.abs(hm))
    ls = jnp.minimum(hm, 0.0) - jnp.log1p(e)                     # log sigmoid
    # sigmoid via EUP approx reciprocal (saves one exp per element)
    sig = jnp.where(hm >= 0.0, 1.0, e) * pl.reciprocal(1.0 + e, approx=True)
    pred = jnp.clip(sig, _EPS, 1.0 - _EPS)                       # clamped sigmoid
    log_p = jnp.clip(ls, _LOG_LO, _LOG_HI)                       # log(clamped pred)
    log_1mp = jnp.clip(ls - hm, _LOG_LO, _LOG_HI)                # log(1 - clamped pred)

    pos_inds = (gt == 1.0).astype(jnp.float32)
    neg_inds = (gt < 1.0).astype(jnp.float32)
    neg_w = (1.0 - gt) ** 4
    pos_sum = jnp.sum(log_p * (1.0 - pred) ** 2 * pos_inds)
    neg_sum = jnp.sum(log_1mp * pred * pred * neg_w * neg_inds)
    npos = jnp.sum(pos_inds)

    lane = jax.lax.broadcasted_iota(jnp.int32, (1, 4), 1)
    stats_ref[0, 0] = (jnp.where(lane == 0, pos_sum, 0.0)
                       + jnp.where(lane == 1, neg_sum, 0.0)
                       + jnp.where(lane == 2, npos, 0.0))


# ---------------------------------- glue ------------------------------------

def init_params(key, cin=3, hidden=32, num_classes=4):
    k1, k2 = jax.random.split(key)
    w1 = jax.random.normal(k1, (9, cin, hidden), jnp.float32) * 0.05
    b1 = jnp.zeros((1, hidden), jnp.float32)
    w2 = jax.random.normal(k2, (hidden, num_classes + 4), jnp.float32) * 0.05
    # hm head bias initialized to -2.19 as in CenterNet; wh/reg biases zero.
    b2 = jnp.concatenate([jnp.full((1, num_classes), -2.19, jnp.float32),
                          jnp.zeros((1, 4), jnp.float32)], axis=1)
    return {'w1': w1, 'b1': b1, 'w2': w2, 'b2': b2, 'num_classes': num_classes}


def model_with_loss_forward(params, batch):
    x = batch['input']                                   # (B, Cin, H, W) NCHW
    B, Cin, H, W = x.shape
    C = int(params['num_classes'])
    hidden = params['w1'].shape[-1]
    n_heads = C + 4
    n_pix = H * W
    k9 = 9 * Cin
    tile_pix = _pick_tile_pix(n_pix)
    n_tiles = n_pix // tile_pix

    # im2col in the wrapper: the 3x3 conv becomes one K=9*Cin dot in-kernel.
    # Staying channels-first means the NCHW input needs NO transpose and puts
    # pixels on the lane axis for every kernel operand and result.
    xp = jnp.pad(x.astype(jnp.float32), ((0, 0), (0, 0), (1, 1), (1, 1)))
    taps = [xp[:, :, dy:dy + H, dx:dx + W] for dy in range(3) for dx in range(3)]
    xcol = jnp.concatenate(taps, axis=1).reshape(B, k9, n_pix).astype(jnp.bfloat16)

    w1t = params['w1'].reshape(k9, hidden).T.astype(jnp.bfloat16)   # (hidden, 9Cin)
    b1t = params['b1'].reshape(hidden, 1).astype(jnp.float32)
    w2t = params['w2'].T.astype(jnp.bfloat16)                       # (C+4, hidden)
    b2t = params['b2'].reshape(n_heads, 1).astype(jnp.float32)

    # gt heatmap: NCHW -> (B, C, n_pix) is a free reshape; bf16 halves its DMA.
    gt = batch['hm'].reshape(B, C, n_pix).astype(jnp.bfloat16)

    kernel = functools.partial(_fused_model_focal_kernel, C)

    grid_spec = pltpu.PrefetchScalarGridSpec(
        num_scalar_prefetch=0,
        grid=(B, n_tiles),
        in_specs=[
            pl.BlockSpec((1, k9, tile_pix), lambda b, t: (b, 0, t)),
            pl.BlockSpec((hidden, k9), lambda b, t: (0, 0)),
            pl.BlockSpec((hidden, 1), lambda b, t: (0, 0)),
            pl.BlockSpec((n_heads, hidden), lambda b, t: (0, 0)),
            pl.BlockSpec((n_heads, 1), lambda b, t: (0, 0)),
            pl.BlockSpec((1, C, tile_pix), lambda b, t: (b, 0, t)),
        ],
        out_specs=[
            pl.BlockSpec((1, C, tile_pix), lambda b, t: (b, 0, t)),
            pl.BlockSpec((1, 4, tile_pix), lambda b, t: (b, 0, t)),
            pl.BlockSpec((1, 1, 1, 4), lambda b, t: (b, t, 0, 0)),
        ],
    )

    hm_flat, whreg_flat, stats = pl.pallas_call(
        kernel,
        grid_spec=grid_spec,
        out_shape=(
            jax.ShapeDtypeStruct((B, C, n_pix), jnp.float32),
            jax.ShapeDtypeStruct((B, 4, n_pix), jnp.float32),
            jax.ShapeDtypeStruct((B, n_tiles, 1, 4), jnp.float32),
        ),
        compiler_params=pltpu.CompilerParams(
            dimension_semantics=("parallel", "parallel"),
            vmem_limit_bytes=48 * 1024 * 1024,   # budgeted for v7x 64 MiB VMEM
        ),
    )(xcol, w1t, b1t, w2t, b2t, gt)

    # outputs are already channels-first: reshapes below are free (no transpose)
    output = {'hm': hm_flat.reshape(B, C, H, W),
              'wh': whreg_flat[:, 0:2, :].reshape(B, 2, H, W),
              'reg': whreg_flat[:, 2:4, :].reshape(B, 2, H, W)}
    outputs = [output]                                   # single-stack model

    # ---- focal loss combine (O(B * n_tiles) scalars) ------------------------
    pos_s = jnp.sum(stats[..., 0])
    neg_s = jnp.sum(stats[..., 1])
    npos = jnp.sum(stats[..., 2])
    hm_loss = jnp.where(npos == 0.0, -neg_s,
                        -(pos_s + neg_s) / jnp.maximum(npos, 1.0))
    hm_loss = hm_loss / NUM_STACKS

    # ---- RegL1 losses on wh and reg: only B*K*2 elements -> plain JAX -------
    ind = batch['ind'].astype(jnp.int32)                 # (B, K)
    mask = batch['reg_mask'].astype(jnp.float32)         # (B, K)
    K = ind.shape[1]
    mask2 = jnp.broadcast_to(mask[:, :, None], (B, K, 2))

    def reg_l1(pred_cp, target):                         # pred_cp: (B, 2, n_pix)
        p = jnp.take_along_axis(pred_cp, ind[:, None, :], axis=2)   # (B, 2, K)
        p = jnp.transpose(p, (0, 2, 1))                             # (B, K, 2)
        d = jnp.abs(p * mask2 - target.astype(jnp.float32) * mask2)
        return jnp.sum(d) / (jnp.sum(mask2) + 1e-4)

    wh_loss = reg_l1(whreg_flat[:, 0:2, :], batch['wh']) / NUM_STACKS
    off_loss = reg_l1(whreg_flat[:, 2:4, :], batch['reg']) / NUM_STACKS

    loss = HM_WEIGHT * hm_loss + WH_WEIGHT * wh_loss + OFF_WEIGHT * off_loss
    loss_stats = {'loss': loss, 'hm_loss': hm_loss,
                  'wh_loss': wh_loss, 'off_loss': off_loss}
    return outputs[-1], loss, loss_stats


# --------------------------- pure-JAX reference -----------------------------

def _reference_forward(params, batch):
    """f32 re-implementation (correctness check only)."""
    x = batch['input'].astype(jnp.float32)
    B, Cin, H, W = x.shape
    C = int(params['num_classes'])
    hidden = params['w1'].shape[-1]
    n_pix = H * W
    xp = jnp.pad(x, ((0, 0), (0, 0), (1, 1), (1, 1)))
    taps = [xp[:, :, dy:dy + H, dx:dx + W] for dy in range(3) for dx in range(3)]
    xcol = jnp.concatenate(taps, axis=1).reshape(B, 9 * Cin, n_pix)
    w1t = params['w1'].reshape(9 * Cin, hidden).T
    feats = jax.nn.relu(jnp.einsum('hk,bkp->bhp', w1t, xcol)
                        + params['b1'].reshape(1, hidden, 1))
    heads = (jnp.einsum('ch,bhp->bcp', params['w2'].T, feats)
             + params['b2'].reshape(1, -1, 1))
    hm_logits, wh, reg = heads[:, :C], heads[:, C:C + 2], heads[:, C + 2:C + 4]

    # gt quantized through bf16 to match the kernel's streaming dtype
    gt = batch['hm'].astype(jnp.bfloat16).astype(jnp.float32).reshape(B, C, n_pix)
    pred = jnp.clip(jax.nn.sigmoid(hm_logits), _EPS, 1.0 - _EPS)
    pos = (gt == 1.0).astype(jnp.float32)
    neg = (gt < 1.0).astype(jnp.float32)
    pos_loss = jnp.sum(jnp.log(pred) * (1.0 - pred) ** 2 * pos)
    neg_loss = jnp.sum(jnp.log(1.0 - pred) * pred ** 2 * (1.0 - gt) ** 4 * neg)
    npos = jnp.sum(pos)
    hm_loss = jnp.where(npos == 0.0, -neg_loss,
                        -(pos_loss + neg_loss) / jnp.maximum(npos, 1.0))

    ind = batch['ind'].astype(jnp.int32)
    K = ind.shape[1]
    mask2 = jnp.broadcast_to(
        batch['reg_mask'].astype(jnp.float32)[:, :, None], (B, K, 2))

    def rl1(p, t):
        g = jnp.transpose(jnp.take_along_axis(p, ind[:, None, :], axis=2),
                          (0, 2, 1))
        return (jnp.sum(jnp.abs(g * mask2 - t.astype(jnp.float32) * mask2))
                / (jnp.sum(mask2) + 1e-4))

    loss = (HM_WEIGHT * hm_loss + WH_WEIGHT * rl1(wh, batch['wh'])
            + OFF_WEIGHT * rl1(reg, batch['reg']))
    return (hm_logits.reshape(B, C, H, W), wh.reshape(B, 2, H, W),
            reg.reshape(B, 2, H, W), loss)


# TODO(synk): DistributedDataParallel / NPU device placement from the original
# trainer is training-infrastructure glue with no kernel equivalent.

if __name__ == "__main__":
    B, Cin, H, W = 2, 3, 16, 16
    C, K, HIDDEN = 4, 8, 32

    params = init_params(jax.random.PRNGKey(42), cin=Cin,
                         hidden=HIDDEN, num_classes=C)

    key = jax.random.PRNGKey(0)
    kx, kh, ki, kc, kw, kr = jax.random.split(key, 6)

    x = jax.random.normal(kx, (B, Cin, H, W), jnp.float32)
    ind = jax.random.randint(ki, (B, K), 0, H * W).astype(jnp.int32)
    cls = jax.random.randint(kc, (B, K), 0, C)
    reg_mask = ((jnp.arange(K)[None, :] < 5).astype(jnp.float32)
                * jnp.ones((B, 1), jnp.float32))
    wh_t = jax.random.uniform(kw, (B, K, 2), jnp.float32, 1.0, 8.0)
    reg_t = jax.random.uniform(kr, (B, K, 2), jnp.float32, 0.0, 1.0)

    # ground-truth heatmap: values in [0, 0.9) with exact-1.0 peaks at (ind, cls)
    hm_rand = jax.random.uniform(kh, (B, H * W, C), jnp.float32) * 0.9
    bidx = jnp.repeat(jnp.arange(B), K)
    hm_rand = hm_rand.at[bidx, ind.reshape(-1), cls.reshape(-1)].set(1.0)
    hm_gt = jnp.transpose(hm_rand.reshape(B, H, W, C), (0, 3, 1, 2))

    batch = {'input': x, 'hm': hm_gt, 'reg_mask': reg_mask,
             'ind': ind, 'wh': wh_t, 'reg': reg_t}

    output, loss, loss_stats = model_with_loss_forward(params, batch)
    jax.block_until_ready((output, loss, loss_stats))

    # correctness check vs pure-JAX f32 reference (loose tol: bf16 MXU + vrcp)
    hm_r, wh_r, reg_r, loss_r = _reference_forward(params, batch)
    assert output['hm'].shape == (B, C, H, W)
    assert output['wh'].shape == (B, 2, H, W)
    assert output['reg'].shape == (B, 2, H, W)
    assert bool(jnp.allclose(output['hm'], hm_r, rtol=2e-2, atol=2e-2))
    assert bool(jnp.allclose(output['wh'], wh_r, rtol=2e-2, atol=2e-2))
    assert bool(jnp.allclose(output['reg'], reg_r, rtol=2e-2, atol=2e-2))
    assert bool(jnp.allclose(loss, loss_r, rtol=5e-2, atol=5e-2))
    assert bool(jnp.isfinite(loss))
    print("KERNEL_OK")
</pallas_src>

<mosaic_0001>
module attributes {stable_mosaic.version = 11 : i64} {
  func.func @_fused_model_focal_kernel(%arg0: i32, %arg1: i32, %arg2: memref<1x27x128xbf16, #tpu.memory_space<vmem>>, %arg3: memref<32x27xbf16, #tpu.memory_space<vmem>>, %arg4: memref<32x1xf32, #tpu.memory_space<vmem>>, %arg5: memref<8x32xbf16, #tpu.memory_space<vmem>>, %arg6: memref<8x1xf32, #tpu.memory_space<vmem>>, %arg7: memref<1x4x128xbf16, #tpu.memory_space<vmem>>, %arg8: memref<1x4x128xf32, #tpu.memory_space<vmem>>, %arg9: memref<1x4x128xf32, #tpu.memory_space<vmem>>, %arg10: memref<1x1x1x4xf32, #tpu.memory_space<vmem>>) attributes {dimension_semantics = [#tpu.dimension_semantics<parallel>, #tpu.dimension_semantics<parallel>], iteration_bounds = array<i64: 2, 2>, scalar_prefetch = 0 : i64, scratch_operands = 0 : i64, tpu.core_type = #tpu.core_type<tc>, window_params = [{transform_indices = @transform_0, window_bounds = array<i64: 1, 27, 128>}, {pipeline_mode = #tpu.pipeline_mode<synchronous>, transform_indices = @transform_1, window_bounds = array<i64: 32, 27>}, {pipeline_mode = #tpu.pipeline_mode<synchronous>, transform_indices = @transform_2, window_bounds = array<i64: 32, 1>}, {pipeline_mode = #tpu.pipeline_mode<synchronous>, transform_indices = @transform_3, window_bounds = array<i64: 8, 32>}, {pipeline_mode = #tpu.pipeline_mode<synchronous>, transform_indices = @transform_4, window_bounds = array<i64: 8, 1>}, {transform_indices = @transform_5, window_bounds = array<i64: 1, 4, 128>}, {transform_indices = @transform_6, window_bounds = array<i64: 1, 4, 128>}, {transform_indices = @transform_7, window_bounds = array<i64: 1, 4, 128>}, {transform_indices = @transform_8, window_bounds = array<i64: 1, 1, 1, 4>}]} {
    %c0 = arith.constant 0 : index
    %c0_0 = arith.constant 0 : index
    %0 = vector.load %arg3[%c0, %c0_0] : memref<32x27xbf16, #tpu.memory_space<vmem>>, vector<32x27xbf16>
    %c0_1 = arith.constant 0 : index
    %c0_2 = arith.constant 0 : index
    %c0_3 = arith.constant 0 : index
    %1 = vector.load %arg2[%c0_1, %c0_2, %c0_3] : memref<1x27x128xbf16, #tpu.memory_space<vmem>>, vector<1x27x128xbf16>
    %2 = vector.shape_cast %1 : vector<1x27x128xbf16> to vector<27x128xbf16>
    %cst = arith.constant dense<0.000000e+00> : vector<32x128xf32>
    %3 = tpu.matmul %0, %2, %cst {dimension_numbers = #tpu.dot_dimension_numbers<[1], [0], [0], [1], [0, 0, 1, 1], [], []>} : vector<32x27xbf16>, vector<27x128xbf16>, vector<32x128xf32> -> vector<32x128xf32>
    %c0_4 = arith.constant 0 : index
    %c0_5 = arith.constant 0 : index
    %4 = vector.load %arg4[%c0_4, %c0_5] : memref<32x1xf32, #tpu.memory_space<vmem>>, vector<32x1xf32>
    %5 = vector.broadcast %4 : vector<32x1xf32> to vector<32x128xf32>
    %6 = arith.addf %3, %5 : vector<32x128xf32>
    %cst_6 = arith.constant 0.000000e+00 : f32
    %7 = vector.broadcast %cst_6 : f32 to vector<32x128xf32>
    %8 = arith.maximumf %6, %7 : vector<32x128xf32>
    %c0_7 = arith.constant 0 : index
    %c0_8 = arith.constant 0 : index
    %9 = vector.load %arg5[%c0_7, %c0_8] : memref<8x32xbf16, #tpu.memory_space<vmem>>, vector<8x32xbf16>
    %10 = arith.truncf %8 : vector<32x128xf32> to vector<32x128xbf16>
    %cst_9 = arith.constant dense<0.000000e+00> : vector<8x128xf32>
    %11 = tpu.matmul %9, %10, %cst_9 {dimension_numbers = #tpu.dot_dimension_numbers<[1], [0], [0], [1], [0, 0, 1, 1], [], []>} : vector<8x32xbf16>, vector<32x128xbf16>, vector<8x128xf32> -> vector<8x128xf32>
    %c0_10 = arith.constant 0 : index
    %c0_11 = arith.constant 0 : index
    %12 = vector.load %arg6[%c0_10, %c0_11] : memref<8x1xf32, #tpu.memory_space<vmem>>, vector<8x1xf32>
    %13 = vector.broadcast %12 : vector<8x1xf32> to vector<8x128xf32>
    %14 = arith.addf %11, %13 : vector<8x128xf32>
    %15 = vector.extract_strided_slice %14 {offsets = [0, 0], sizes = [4, 128], strides = [1, 1]} : vector<8x128xf32> to vector<4x128xf32>
    %c0_12 = arith.constant 0 : index
    %c0_13 = arith.constant 0 : index
    %c0_14 = arith.constant 0 : index
    %16 = vector.load %arg8[%c0_12, %c0_13, %c0_14] : memref<1x4x128xf32, #tpu.memory_space<vmem>>, vector<1x4x128xf32>
    %17 = vector.shape_cast %16 : vector<1x4x128xf32> to vector<4x128xf32>
    %18 = vector.shape_cast %15 : vector<4x128xf32> to vector<1x4x128xf32>
    tpu.vector_store %arg8[%c0_12, %c0_13, %c0_14], %18 {strides = array<i32>} : memref<1x4x128xf32, #tpu.memory_space<vmem>>, vector<1x4x128xf32>,
    %19 = vector.extract_strided_slice %14 {offsets = [4, 0], sizes = [4, 128], strides = [1, 1]} : vector<8x128xf32> to vector<4x128xf32>
    %c0_15 = arith.constant 0 : index
    %c0_16 = arith.constant 0 : index
    %c0_17 = arith.constant 0 : index
    %20 = vector.load %arg9[%c0_15, %c0_16, %c0_17] : memref<1x4x128xf32, #tpu.memory_space<vmem>>, vector<1x4x128xf32>
    %21 = vector.shape_cast %20 : vector<1x4x128xf32> to vector<4x128xf32>
    %22 = vector.shape_cast %19 : vector<4x128xf32> to vector<1x4x128xf32>
    tpu.vector_store %arg9[%c0_15, %c0_16, %c0_17], %22 {strides = array<i32>} : memref<1x4x128xf32, #tpu.memory_space<vmem>>, vector<1x4x128xf32>,
    %c0_18 = arith.constant 0 : index
    %c0_19 = arith.constant 0 : index
    %c0_20 = arith.constant 0 : index
    %23 = vector.load %arg7[%c0_18, %c0_19, %c0_20] : memref<1x4x128xbf16, #tpu.memory_space<vmem>>, vector<1x4x128xbf16>
    %24 = vector.shape_cast %23 : vector<1x4x128xbf16> to vector<4x128xbf16>
    %25 = arith.extf %24 : vector<4x128xbf16> to vector<4x128xf32>
    %26 = math.absf %15 : vector<4x128xf32>
    %cst_21 = arith.constant 0.000000e+00 : f32
    %27 = vector.broadcast %cst_21 : f32 to vector<4x128xf32>
    %28 = arith.subf %27, %26 : vector<4x128xf32>
    %29 = math.exp %28 : vector<4x128xf32>
    %cst_22 = arith.constant 0.000000e+00 : f32
    %30 = vector.broadcast %cst_22 : f32 to vector<4x128xf32>
    %31 = arith.minimumf %15, %30 : vector<4x128xf32>
    %32 = math.log1p %29 : vector<4x128xf32>
    %33 = arith.subf %31, %32 : vector<4x128xf32>
    %cst_23 = arith.constant 0.000000e+00 : f32
    %34 = vector.broadcast %cst_23 : f32 to vector<4x128xf32>
    %35 = arith.cmpf oge, %15, %34 : vector<4x128xf32>
    %cst_24 = arith.constant 1.000000e+00 : f32
    %36 = vector.broadcast %cst_24 : f32 to vector<4x128xf32>
    %37 = arith.select %35, %36, %29 : vector<4x128xi1>, vector<4x128xf32>
    %cst_25 = arith.constant 1.000000e+00 : f32
    %38 = vector.broadcast %cst_25 : f32 to vector<4x128xf32>
    %39 = arith.addf %38, %29 : vector<4x128xf32>
    %40 = tpu.reciprocal %39 {approx = true} : vector<4x128xf32> -> vector<4x128xf32>
    %41 = arith.mulf %37, %40 : vector<4x128xf32>
    %cst_26 = arith.constant 9.99999974E-5 : f32
    %cst_27 = arith.constant 0.999899983 : f32
    %42 = vector.broadcast %cst_26 : f32 to vector<4x128xf32>
    %43 = arith.maximumf %42, %41 : vector<4x128xf32>
    %44 = vector.broadcast %cst_27 : f32 to vector<4x128xf32>
    %45 = arith.minimumf %44, %43 : vector<4x128xf32>
    %cst_28 = arith.constant -9.21034049 : f32
    %cst_29 = arith.constant -1.000050e-04 : f32
    %46 = vector.broadcast %cst_28 : f32 to vector<4x128xf32>
    %47 = arith.maximumf %46, %33 : vector<4x128xf32>
    %48 = vector.broadcast %cst_29 : f32 to vector<4x128xf32>
    %49 = arith.minimumf %48, %47 : vector<4x128xf32>
    %50 = arith.subf %33, %15 : vector<4x128xf32>
    %cst_30 = arith.constant -9.21034049 : f32
    %cst_31 = arith.constant -1.000050e-04 : f32
    %51 = vector.broadcast %cst_30 : f32 to vector<4x128xf32>
    %52 = arith.maximumf %51, %50 : vector<4x128xf32>
    %53 = vector.broadcast %cst_31 : f32 to vector<4x128xf32>
    %54 = arith.minimumf %53, %52 : vector<4x128xf32>
    %cst_32 = arith.constant 1.000000e+00 : f32
    %55 = vector.broadcast %cst_32 : f32 to vector<4x128xf32>
    %56 = arith.cmpf oeq, %25, %55 : vector<4x128xf32>
    %57 = arith.extui %56 : vector<4x128xi1> to vector<4x128xi32>
    %58 = arith.sitofp %57 : vector<4x128xi32> to vector<4x128xf32>
    %cst_33 = arith.constant 1.000000e+00 : f32
    %59 = vector.broadcast %cst_33 : f32 to vector<4x128xf32>
    %60 = arith.cmpf olt, %25, %59 : vector<4x128xf32>
    %61 = arith.extui %60 : vector<4x128xi1> to vector<4x128xi32>
    %62 = arith.sitofp %61 : vector<4x128xi32> to vector<4x128xf32>
    %cst_34 = arith.constant 1.000000e+00 : f32
    %63 = vector.broadcast %cst_34 : f32 to vector<4x128xf32>
    %64 = arith.subf %63, %25 : vector<4x128xf32>
    %65 = arith.mulf %64, %64 : vector<4x128xf32>
    %66 = arith.mulf %65, %65 : vector<4x128xf32>
    %cst_35 = arith.constant 1.000000e+00 : f32
    %67 = vector.broadcast %cst_35 : f32 to vector<4x128xf32>
    %68 = arith.subf %67, %45 : vector<4x128xf32>
    %69 = arith.mulf %68, %68 : vector<4x128xf32>
    %70 = arith.mulf %49, %69 : vector<4x128xf32>
    %71 = arith.mulf %70, %58 : vector<4x128xf32>
    %72 = vector.shape_cast %71 : vector<4x128xf32> to vector<1x4x128xf32>
    %cst_36 = arith.constant dense<0.000000e+00> : vector<1xf32>
    %73 = vector.multi_reduction <add>, %72, %cst_36 [1, 2] : vector<1x4x128xf32> to vector<1xf32>
    %74 = vector.shape_cast %73 : vector<1xf32> to vector<1x1x1xf32>
    %75 = vector.extract %74[0, 0, 0] : f32 from vector<1x1x1xf32>
    %76 = arith.mulf %54, %45 : vector<4x128xf32>
    %77 = arith.mulf %76, %45 : vector<4x128xf32>
    %78 = arith.mulf %77, %66 : vector<4x128xf32>
    %79 = arith.mulf %78, %62 : vector<4x128xf32>
    %80 = vector.shape_cast %79 : vector<4x128xf32> to vector<1x4x128xf32>
    %cst_37 = arith.constant dense<0.000000e+00> : vector<1xf32>
    %81 = vector.multi_reduction <add>, %80, %cst_37 [1, 2] : vector<1x4x128xf32> to vector<1xf32>
    %82 = vector.shape_cast %81 : vector<1xf32> to vector<1x1x1xf32>
    %83 = vector.extract %82[0, 0, 0] : f32 from vector<1x1x1xf32>
    %84 = vector.shape_cast %58 : vector<4x128xf32> to vector<1x4x128xf32>
    %cst_38 = arith.constant dense<0.000000e+00> : vector<1xf32>
    %85 = vector.multi_reduction <add>, %84, %cst_38 [1, 2] : vector<1x4x128xf32> to vector<1xf32>
    %86 = vector.shape_cast %85 : vector<1xf32> to vector<1x1x1xf32>
    %87 = vector.extract %86[0, 0, 0] : f32 from vector<1x1x1xf32>
    %88 = tpu.iota {dimensions = array<i32: 1>} : vector<1x4xi32>
    %c0_i32 = arith.constant 0 : i32
    %89 = vector.broadcast %c0_i32 : i32 to vector<1x4xi32>
    %90 = arith.cmpi eq, %88, %89 : vector<1x4xi32>
    %cst_39 = arith.constant 0.000000e+00 : f32
    %91 = vector.broadcast %75 : f32 to vector<1x4xf32>
    %92 = vector.broadcast %cst_39 : f32 to vector<1x4xf32>
    %93 = arith.select %90, %91, %92 : vector<1x4xi1>, vector<1x4xf32>
    %c1_i32 = arith.constant 1 : i32
    %94 = vector.broadcast %c1_i32 : i32 to vector<1x4xi32>
    %95 = arith.cmpi eq, %88, %94 : vector<1x4xi32>
    %cst_40 = arith.constant 0.000000e+00 : f32
    %96 = vector.broadcast %83 : f32 to vector<1x4xf32>
    %97 = vector.broadcast %cst_40 : f32 to vector<1x4xf32>
    %98 = arith.select %95, %96, %97 : vector<1x4xi1>, vector<1x4xf32>
    %99 = arith.addf %93, %98 : vector<1x4xf32>
    %c2_i32 = arith.constant 2 : i32
    %100 = vector.broadcast %c2_i32 : i32 to vector<1x4xi32>
    %101 = arith.cmpi eq, %88, %100 : vector<1x4xi32>
    %cst_41 = arith.constant 0.000000e+00 : f32
    %102 = vector.broadcast %87 : f32 to vector<1x4xf32>
    %103 = vector.broadcast %cst_41 : f32 to vector<1x4xf32>
    %104 = arith.select %101, %102, %103 : vector<1x4xi1>, vector<1x4xf32>
    %105 = arith.addf %99, %104 : vector<1x4xf32>
    %c0_42 = arith.constant 0 : index
    %c0_43 = arith.constant 0 : index
    %c0_44 = arith.constant 0 : index
    %c0_45 = arith.constant 0 : index
    %106 = vector.load %arg10[%c0_42, %c0_43, %c0_44, %c0_45] : memref<1x1x1x4xf32, #tpu.memory_space<vmem>>, vector<1x1x1x4xf32>
    %107 = vector.shape_cast %106 : vector<1x1x1x4xf32> to vector<1x4xf32>
    %108 = vector.shape_cast %105 : vector<1x4xf32> to vector<1x1x1x4xf32>
    tpu.vector_store %arg10[%c0_42, %c0_43, %c0_44, %c0_45], %108 {strides = array<i32>} : memref<1x1x1x4xf32, #tpu.memory_space<vmem>>, vector<1x1x1x4xf32>,
    return
  }
  func.func @transform_0(%arg0: i32, %arg1: i32) -> (i32, i32, i32) {
    %c0_i32 = arith.constant 0 : i32
    %c0_i32_0 = arith.constant 0 : i32
    return %arg0, %c0_i32, %arg1 : i32, i32, i32
  }
  func.func @transform_1(%arg0: i32, %arg1: i32) -> (i32, i32) {
    %c0_i32 = arith.constant 0 : i32
    %c0_i32_0 = arith.constant 0 : i32
    %c0_i32_1 = arith.constant 0 : i32
    return %c0_i32, %c0_i32_0 : i32, i32
  }
  func.func @transform_2(%arg0: i32, %arg1: i32) -> (i32, i32) {
    %c0_i32 = arith.constant 0 : i32
    %c0_i32_0 = arith.constant 0 : i32
    %c0_i32_1 = arith.constant 0 : i32
    return %c0_i32, %c0_i32_0 : i32, i32
  }
  func.func @transform_3(%arg0: i32, %arg1: i32) -> (i32, i32) {
    %c0_i32 = arith.constant 0 : i32
    %c0_i32_0 = arith.constant 0 : i32
    %c0_i32_1 = arith.constant 0 : i32
    return %c0_i32, %c0_i32_0 : i32, i32
  }
  func.func @transform_4(%arg0: i32, %arg1: i32) -> (i32, i32) {
    %c0_i32 = arith.constant 0 : i32
    %c0_i32_0 = arith.constant 0 : i32
    %c0_i32_1 = arith.constant 0 : i32
    return %c0_i32, %c0_i32_0 : i32, i32
  }
  func.func @transform_5(%arg0: i32, %arg1: i32) -> (i32, i32, i32) {
    %c0_i32 = arith.constant 0 : i32
    %c0_i32_0 = arith.constant 0 : i32
    return %arg0, %c0_i32, %arg1 : i32, i32, i32
  }
  func.func @transform_6(%arg0: i32, %arg1: i32) -> (i32, i32, i32) {
    %c0_i32 = arith.constant 0 : i32
    %c0_i32_0 = arith.constant 0 : i32
    return %arg0, %c0_i32, %arg1 : i32, i32, i32
  }
  func.func @transform_7(%arg0: i32, %arg1: i32) -> (i32, i32, i32) {
    %c0_i32 = arith.constant 0 : i32
    %c0_i32_0 = arith.constant 0 : i32
    return %arg0, %c0_i32, %arg1 : i32, i32, i32
  }
  func.func @transform_8(%arg0: i32, %arg1: i32) -> (i32, i32, i32, i32) {
    %c0_i32 = arith.constant 0 : i32
    %c0_i32_0 = arith.constant 0 : i32
    %c0_i32_1 = arith.constant 0 : i32
    return %arg0, %arg1, %c0_i32, %c0_i32_0 : i32, i32, i32, i32
  }
}

</mosaic_0001>

<llo_original>
// kernel: tpu_custom_call.1
$region0: #{tpu_custom_call.1}
  #allocation0 [shape = 'u32[]', space=smem, size = 0x4, offset = 0x4, fixed_abs, tag = 'smem constant byte address 0x4 - core index']
  #allocation1 [shape = 'u32[144,128]{1,0:T(1,128)}', space=vmem, size = 0x12000, scoped, tag = 'internal scratch']
  %s0 = inlined_call_operand.vmem [shape: bf16[2,27,256], index: 0, kind: input, shape index: {}]
  %s1 = inlined_call_operand.vmem [shape: bf16[32,27], index: 1, kind: input, shape index: {}]
  %s2 = inlined_call_operand.vmem [shape: f32[32,1], index: 2, kind: input, shape index: {}]
  %s3 = inlined_call_operand.vmem [shape: bf16[8,32], index: 3, kind: input, shape index: {}]
  %s4 = inlined_call_operand.vmem [shape: f32[8,1], index: 4, kind: input, shape index: {}]
  %s5 = inlined_call_operand.vmem [shape: bf16[2,4,256], index: 5, kind: input, shape index: {}]
  %s6 = inlined_call_operand.hbm [shape: f32[2,4,256], index: 6, kind: output, shape index: {0}]
  %s7 = inlined_call_operand.hbm [shape: f32[2,4,256], index: 7, kind: output, shape index: {1}]
  %s8 = inlined_call_operand.hbm [shape: f32[2,2,1,4], index: 8, kind: output, shape index: {2}]
  %9 = xla_tuple %s6, %s7, %s8
  %s10 = sld [smem:[#allocation0]]
  $region114: #{tpu_custom_call.1} parent=0
    _
  %s12 = ssub.s32 1, %s10
  %s13 = scalar_select 0, %s12, %s10
  $region1: #{tpu_custom_call.1} parent=0
    #allocation2 [shape = 'u8[16384]{0}', space=vmem, size = 0x4000, scoped, tag = 'input window, operand 0']
    #allocation3 [shape = 'u8[4096]{0}', space=vmem, size = 0x1000, scoped, tag = 'output window, operand 0']
    #allocation4 [shape = 's32[2]{0}', space=sflag, size = 0x8, scoped, tag = 'scoped memory for tpu_custom_call.1']
    #allocation5 [shape = 'u8[4096]{0}', space=vmem, size = 0x1000, scoped, tag = 'output window, operand 1']
    #allocation6 [shape = 's32[2]{0}', space=sflag, size = 0x8, scoped, tag = 'scoped memory for tpu_custom_call.1']
    #allocation7 [shape = 'u8[1024]{0}', space=vmem, size = 0x400, scoped, tag = 'output window, operand 2']
    %14 = vsyncpa [#allocation4], 0
    %s15 = scalar_lea.sflag [#allocation4], 1
    %16 = vsyncpa %s15, 0
    %17 = vsyncpa [#allocation6], 0
    %s18 = scalar_lea.sflag [#allocation6], 1
    %19 = vsyncpa %s18, 0
    loop: start=0, step=1, limit=6
    $region2: #{tpu_custom_call.1} parent=1 // loop_pre_header
      _
    $region3: #{tpu_custom_call.1} parent=1 // loop_header
      %s21 = sphi 0, %s25
      %p22 = scmp.ge.s32.totalorder %s21, 6
      %s28 = sphi 0, %s40
      %s29 = sphi 0, %s36
      %s30 = sphi 0, %s28
      %s31 = sphi 0, %s29
      %s32 = sphi 0, %s30
      %s33 = sphi 0, %s31
      %s45 = sphi 0, %s47
      %s48 = sphi 0, %s45
      %s49 = sphi 0, %s48
      %s65 = sphi 0, %s49
      %s69 = sphi 0, %s69
      %s71 = sphi 0, %s69
      %s72 = sphi 0, %s71
      %s86 = sphi 0, %s72
      %s90 = sphi 0, %s90
      %s92 = sphi 0, %s90
      %s93 = sphi 0, %s92
      %s107 = sphi 0, %s93
      %s111 = sphi 0, %s111
      %s113 = sphi 0, %s111
      %s114 = sphi 0, %s113
      %s128 = sphi 0, %s114
      %s132 = sphi 0, %s132
      %s134 = sphi 0, %s132
      %s135 = sphi 0, %s134
      %s149 = sphi 0, %s135
      %s157 = sphi 0, %s159
      %s160 = sphi 0, %s157
      %s161 = sphi 0, %s160
      %s177 = sphi 0, %s161
      %s185 = sphi 0, %s187
      %s188 = sphi 0, %s185
      %s189 = sphi 0, %s188
      %s205 = sphi 0, %s189
      %s213 = sphi 0, %s215
      %s216 = sphi 0, %s213
      %s217 = sphi 0, %s216
      %s233 = sphi 0, %s217
      %s241 = sphi 0, %s243
      %s244 = sphi 0, %s241
      %s245 = sphi 0, %s244
      %s261 = sphi 0, %s245
    $region4: #{tpu_custom_call.1} parent=1 // loop_header_branch
      %24 = sbr.rel (%p22) target = $region8
    $region5: #{tpu_custom_call.1} parent=1 // loop_body
      %s26 = ssub.s32 %s21, 1
      %s27 = ssub.s32 %s21, 2
      %s34 = sadd.s32 1, %s29
      %p35 = scmp.ge.s32.totalorder %s34, 2
      %s36 = scalar_select %p35, 0, %s34
      %s37 = sadd.s32 1, %s28
      %s38 = scalar_select %p35, %s37, %s28
      %p39 = scmp.ge.s32.totalorder %s38, 2
      %s40 = scalar_select %p39, 0, %s38
      %s41 = ssub.s32 %s28, %s40
      %s42 = ssub.s32 %s29, %s36
      %s43 = sor.u32 %s41, %s42
      %p44 = scmp.eq.s32.totalorder %s43, 0
      %s46 = sadd.s32 %s45, 1
      %s47 = scalar_select %p44, %s45, %s46
      %p50 = pneg %p44
      %p51 = scmp.eq.s32.totalorder %s21, 3
      %p52 = por %p50, %p51
      %p53 = scmp.ne.s32.totalorder %s45, %s48
      %p54 = scmp.eq.s32.totalorder %s21, 0
      %p55 = por %p53, %p54
      %p56 = scmp.ne.s32.totalorder %s45, %s48
      %p57 = scmp.eq.s32.totalorder %s26, 3
      %p58 = por %p56, %p57
      %p59 = scmp.ne.s32.totalorder %s48, %s49
      %p60 = scmp.eq.s32.totalorder %s26, 0
      %p61 = por %p59, %p60
      %p62 = scmp.ne.s32.totalorder %s48, %s49
      %p63 = scmp.eq.s32.totalorder %s27, 3
      %p64 = por %p62, %p63
      %p66 = scmp.ne.s32.totalorder %s49, %s65
      %p67 = scmp.eq.s32.totalorder %s27, 0
      %p68 = por %p66, %p67
      %s70 = sadd.s32 %s69, 1
      %p73 = scmp.eq.s32.totalorder %s21, 3
      %p74 = scmp.ne.s32.totalorder %s69, %s71
      %p75 = scmp.eq.s32.totalorder %s21, 0
      %p76 = por %p74, %p75
      %p77 = scmp.ne.s32.totalorder %s69, %s71
      %p78 = scmp.eq.s32.totalorder %s26, 3
      %p79 = por %p77, %p78
      %p80 = scmp.ne.s32.totalorder %s71, %s72
      %p81 = scmp.eq.s32.totalorder %s26, 0
      %p82 = por %p80, %p81
      %p83 = scmp.ne.s32.totalorder %s71, %s72
      %p84 = scmp.eq.s32.totalorder %s27, 3
      %p85 = por %p83, %p84
      %p87 = scmp.ne.s32.totalorder %s72, %s86
      %p88 = scmp.eq.s32.totalorder %s27, 0
      %p89 = por %p87, %p88
      %s91 = sadd.s32 %s90, 1
      %p94 = scmp.eq.s32.totalorder %s21, 3
      %p95 = scmp.ne.s32.totalorder %s90, %s92
      %p96 = scmp.eq.s32.totalorder %s21, 0
      %p97 = por %p95, %p96
      %p98 = scmp.ne.s32.totalorder %s90, %s92
      %p99 = scmp.eq.s32.totalorder %s26, 3
      %p100 = por %p98, %p99
      %p101 = scmp.ne.s32.totalorder %s92, %s93
      %p102 = scmp.eq.s32.totalorder %s26, 0
      %p103 = por %p101, %p102
      %p104 = scmp.ne.s32.totalorder %s92, %s93
      %p105 = scmp.eq.s32.totalorder %s27, 3
      %p106 = por %p104, %p105
      %p108 = scmp.ne.s32.totalorder %s93, %s107
      %p109 = scmp.eq.s32.totalorder %s27, 0
      %p110 = por %p108, %p109
      %s112 = sadd.s32 %s111, 1
      %p115 = scmp.eq.s32.totalorder %s21, 3
      %p116 = scmp.ne.s32.totalorder %s111, %s113
      %p117 = scmp.eq.s32.totalorder %s21, 0
      %p118 = por %p116, %p117
      %p119 = scmp.ne.s32.totalorder %s111, %s113
      %p120 = scmp.eq.s32.totalorder %s26, 3
      %p121 = por %p119, %p120
      %p122 = scmp.ne.s32.totalorder %s113, %s114
      %p123 = scmp.eq.s32.totalorder %s26, 0
      %p124 = por %p122, %p123
      %p125 = scmp.ne.s32.totalorder %s113, %s114
      %p126 = scmp.eq.s32.totalorder %s27, 3
      %p127 = por %p125, %p126
      %p129 = scmp.ne.s32.totalorder %s114, %s128
      %p130 = scmp.eq.s32.totalorder %s27, 0
      %p131 = por %p129, %p130
      %s133 = sadd.s32 %s132, 1
      %p136 = scmp.eq.s32.totalorder %s21, 3
      %p137 = scmp.ne.s32.totalorder %s132, %s134
      %p138 = scmp.eq.s32.totalorder %s21, 0
      %p139 = por %p137, %p138
      %p140 = scmp.ne.s32.totalorder %s132, %s134
      %p141 = scmp.eq.s32.totalorder %s26, 3
      %p142 = por %p140, %p141
      %p143 = scmp.ne.s32.totalorder %s134, %s135
      %p144 = scmp.eq.s32.totalorder %s26, 0
      %p145 = por %p143, %p144
      %p146 = scmp.ne.s32.totalorder %s134, %s135
      %p147 = scmp.eq.s32.totalorder %s27, 3
      %p148 = por %p146, %p147
      %p150 = scmp.ne.s32.totalorder %s135, %s149
      %p151 = scmp.eq.s32.totalorder %s27, 0
      %p152 = por %p150, %p151
      %s153 = ssub.s32 %s28, %s40
      %s154 = ssub.s32 %s29, %s36
      %s155 = sor.u32 %s153, %s154
      %p156 = scmp.eq.s32.totalorder %s155, 0
      %s158 = sadd.s32 %s157, 1
      %s159 = scalar_select %p156, %s157, %s158
      %p162 = pneg %p156
      %p163 = scmp.eq.s32.totalorder %s21, 3
      %p164 = por %p162, %p163
      %p165 = scmp.ne.s32.totalorder %s157, %s160
      %p166 = scmp.eq.s32.totalorder %s21, 0
      %p167 = por %p165, %p166
      %p168 = scmp.ne.s32.totalorder %s157, %s160
      %p169 = scmp.eq.s32.totalorder %s26, 3
      %p170 = por %p168, %p169
      %p171 = scmp.ne.s32.totalorder %s160, %s161
      %p172 = scmp.eq.s32.totalorder %s26, 0
      %p173 = por %p171, %p172
      %p174 = scmp.ne.s32.totalorder %s160, %s161
      %p175 = scmp.eq.s32.totalorder %s27, 3
      %p176 = por %p174, %p175
      %p178 = scmp.ne.s32.totalorder %s161, %s177
      %p179 = scmp.eq.s32.totalorder %s27, 0
      %p180 = por %p178, %p179
      %s181 = ssub.s32 %s28, %s40
      %s182 = ssub.s32 %s29, %s36
      %s183 = sor.u32 %s181, %s182
      %p184 = scmp.eq.s32.totalorder %s183, 0
      %s186 = sadd.s32 %s185, 1
      %s187 = scalar_select %p184, %s185, %s186
      %p190 = pneg %p184
      %p191 = scmp.eq.s32.totalorder %s21, 3
      %p192 = por %p190, %p191
      %p193 = scmp.ne.s32.totalorder %s185, %s188
      %p194 = scmp.eq.s32.totalorder %s21, 0
      %p195 = por %p193, %p194
      %p196 = scmp.ne.s32.totalorder %s185, %s188
      %p197 = scmp.eq.s32.totalorder %s26, 3
      %p198 = por %p196, %p197
      %p199 = scmp.ne.s32.totalorder %s188, %s189
      %p200 = scmp.eq.s32.totalorder %s26, 0
      %p201 = por %p199, %p200
      %p202 = scmp.ne.s32.totalorder %s188, %s189
      %p203 = scmp.eq.s32.totalorder %s27, 3
      %p204 = por %p202, %p203
      %p206 = scmp.ne.s32.totalorder %s189, %s205
      %p207 = scmp.eq.s32.totalorder %s27, 0
      %p208 = por %p206, %p207
      %s209 = ssub.s32 %s28, %s40
      %s210 = ssub.s32 %s29, %s36
      %s211 = sor.u32 %s209, %s210
      %p212 = scmp.eq.s32.totalorder %s211, 0
      %s214 = sadd.s32 %s213, 1
      %s215 = scalar_select %p212, %s213, %s214
      %p218 = pneg %p212
      %p219 = scmp.eq.s32.totalorder %s21, 3
      %p220 = por %p218, %p219
      %p221 = scmp.ne.s32.totalorder %s213, %s216
      %p222 = scmp.eq.s32.totalorder %s21, 0
      %p223 = por %p221, %p222
      %p224 = scmp.ne.s32.totalorder %s213, %s216
      %p225 = scmp.eq.s32.totalorder %s26, 3
      %p226 = por %p224, %p225
      %p227 = scmp.ne.s32.totalorder %s216, %s217
      %p228 = scmp.eq.s32.totalorder %s26, 0
      %p229 = por %p227, %p228
      %p230 = scmp.ne.s32.totalorder %s216, %s217
      %p231 = scmp.eq.s32.totalorder %s27, 3
      %p232 = por %p230, %p231
      %p234 = scmp.ne.s32.totalorder %s217, %s233
      %p235 = scmp.eq.s32.totalorder %s27, 0
      %p236 = por %p234, %p235
      %s237 = ssub.s32 %s28, %s40
      %s238 = ssub.s32 %s29, %s36
      %s239 = sor.u32 %s237, %s238
      %p240 = scmp.eq.s32.totalorder %s239, 0
      %s242 = sadd.s32 %s241, 1
      %s243 = scalar_select %p240, %s241, %s242
      %p246 = pneg %p240
      %p247 = scmp.eq.s32.totalorder %s21, 3
      %p248 = por %p246, %p247
      %p249 = scmp.ne.s32.totalorder %s241, %s244
      %p250 = scmp.eq.s32.totalorder %s21, 0
      %p251 = por %p249, %p250
      %p252 = scmp.ne.s32.totalorder %s241, %s244
      %p253 = scmp.eq.s32.totalorder %s26, 3
      %p254 = por %p252, %p253
      %p255 = scmp.ne.s32.totalorder %s244, %s245
      %p256 = scmp.eq.s32.totalorder %s26, 0
      %p257 = por %p255, %p256
      %p258 = scmp.ne.s32.totalorder %s244, %s245
      %p259 = scmp.eq.s32.totalorder %s27, 3
      %p260 = por %p258, %p259
      %p262 = scmp.ne.s32.totalorder %s245, %s261
      %p263 = scmp.eq.s32.totalorder %s27, 0
      %p264 = por %p262, %p263
      %p265 = scmp.le.s32.totalorder 1, %s21
      %p266 = scmp.lt.s32.totalorder %s21, 5
      %p267 = pnand %p265, %p266
      %p268 = pneg %p267
      // Predicated region
      $region9: #{tpu_custom_call.1} parent=5 // pred_check
        _
      $region10: #{tpu_custom_call.1} parent=5 // pred_check_branch
        %270 = sbr.rel (%p267) target = $region12
      $region11: #{tpu_custom_call.1} parent=5 // pred_region
        %s271 = ssub.s32 %s21, 1
        // Predicated region
        $region13: #{tpu_custom_call.1} parent=11 // pred_check
          %p272 = pneg %p82
        $region14: #{tpu_custom_call.1} parent=11 // pred_check_branch
          %274 = sbr.rel (%p272) target = $region16
        $region15: #{tpu_custom_call.1} parent=11 // pred_region
          _
        $region16: #{tpu_custom_call.1} parent=11 // pred_fallthru
          _
        // Predicated region
        $region17: #{tpu_custom_call.1} parent=11 // pred_check
          %p275 = pneg %p103
        $region18: #{tpu_custom_call.1} parent=11 // pred_check_branch
          %277 = sbr.rel (%p275) target = $region20
        $region19: #{tpu_custom_call.1} parent=11 // pred_region
          _
        $region20: #{tpu_custom_call.1} parent=11 // pred_fallthru
          _
        // Predicated region
        $region21: #{tpu_custom_call.1} parent=11 // pred_check
          %p278 = pneg %p124
        $region22: #{tpu_custom_call.1} parent=11 // pred_check_branch
          %280 = sbr.rel (%p278) target = $region24
        $region23: #{tpu_custom_call.1} parent=11 // pred_region
          _
        $region24: #{tpu_custom_call.1} parent=11 // pred_fallthru
          _
        // Predicated region
        $region25: #{tpu_custom_call.1} parent=11 // pred_check
          %p281 = pneg %p145
        $region26: #{tpu_custom_call.1} parent=11 // pred_check_branch
          %283 = sbr.rel (%p281) target = $region28
        $region27: #{tpu_custom_call.1} parent=11 // pred_region
          _
        $region28: #{tpu_custom_call.1} parent=11 // pred_fallthru
          _
      $region12: #{tpu_custom_call.1} parent=5 // pred_fallthru
        _
      %p284 = scmp.lt.s32.totalorder %s21, 4
      // Predicated region
      $region29: #{tpu_custom_call.1} parent=5 // pred_check
        %p285 = pneg %p284
      $region30: #{tpu_custom_call.1} parent=5 // pred_check_branch
        %287 = sbr.rel (%p285) target = $region32
      $region31: #{tpu_custom_call.1} parent=5 // pred_region
        // Predicated region
        $region33: #{tpu_custom_call.1} parent=31 // pred_check
          %p288 = pneg %p55
        $region34: #{tpu_custom_call.1} parent=31 // pred_check_branch
          %290 = sbr.rel (%p288) target = $region36
        $region35: #{tpu_custom_call.1} parent=31 // pred_region
          %s291 = sand.u32 %s45, 1
          %s292 = sand.u32 %s45, 1
          %s293 = smul.addr %s292, 16
          %s294 = scalar_lea.vmem [#allocation2], %s293
          %s295 = smul.addr %s28, 8
          %s296 = sadd.s32 %s29, %s295
          %s297 = smul.addr %s296, 4
          %s298 = scalar_lea.vmem %s0, %s297
          // Predicated region
          $region37: #{tpu_custom_call.1} parent=35 // pred_check
            _
          $region38: #{tpu_custom_call.1} parent=35 // pred_check_branch
            %300 = sbr.rel (0) target = $region40
          $region39: #{tpu_custom_call.1} parent=35 // pred_region
            // Predicated region
            $region41: #{tpu_custom_call.1} parent=39 // pred_check
              _
            $region42: #{tpu_custom_call.1} parent=39 // pred_check_branch
              %302 = sbr.rel target = $region44
            $region43: #{tpu_custom_call.1} parent=39 // pred_region
              // Predicated region
              $region56: #{tpu_custom_call.1} parent=43 // pred_check
                _
              $region57: #{tpu_custom_call.1} parent=43 // pred_check_branch
                %323 = sbr.rel (0) target = $region59
              $region58: #{tpu_custom_call.1} parent=43 // pred_region
                loop: start=0, step=1, limit=1
                $region60: #{tpu_custom_call.1} parent=58 // loop_pre_header
                  _
                $region61: #{tpu_custom_call.1} parent=58 // loop_header
                  %s325 = sphi 0, %s329
                  %p326 = scmp.ge.s32.totalorder %s325, 1
                  %s330 = sphi %s298, %s298
                  %s331 = sphi %s294, %s294
                $region62: #{tpu_custom_call.1} parent=58 // loop_header_branch
                  %328 = sbr.rel (%p326) target = $region66
                $region63: #{tpu_custom_call.1} parent=58 // loop_body
                  _
                $region64: #{tpu_custom_call.1} parent=58 // loop_footer
                  %s329 = sadd.s32 1, %s325
                $region65: #{tpu_custom_call.1} parent=58 // loop_footer_branch
                  %324 = sbr.rel target = $region61
                $region66: #{tpu_custom_call.1} parent=58 // loop_exit
                  _
                loop: start=0, step=1, limit=1
                $region67: #{tpu_custom_call.1} parent=58 // loop_pre_header
                  _
                $region68: #{tpu_custom_call.1} parent=58 // loop_header
                  %s334 = sphi 0, %s338
                  %p335 = scmp.ge.s32.totalorder %s334, 1
                  %s339 = sphi %s298, %s298
                  %s340 = sphi %s294, %s294
                $region69: #{tpu_custom_call.1} parent=58 // loop_header_branch
                  %337 = sbr.rel (%p335) target = $region73
                $region70: #{tpu_custom_call.1} parent=58 // loop_body
                  %v341 = vld [vmem:[%s339] sm:$0xf]
                  %342 = vst [vmem:[%s340] sm:$0xf] %v341
                  %v343 = vld [vmem:[%s339 + $0x8] sm:$0xf]
                  %344 = vst [vmem:[%s340 + $0x4] sm:$0xf] %v343
                  %v345 = vld [vmem:[%s339 + $0x10] sm:$0xf]
                  %346 = vst [vmem:[%s340 + $0x8] sm:$0xf] %v345
                  %v347 = vld [vmem:[%s339 + $0x18] sm:$0xf]
                  %348 = vst [vmem:[%s340 + $0xc] sm:$0xf] %v347
                $region71: #{tpu_custom_call.1} parent=58 // loop_footer
                  %s338 = sadd.s32 1, %s334
                $region72: #{tpu_custom_call.1} parent=58 // loop_footer_branch
                  %333 = sbr.rel target = $region68
                $region73: #{tpu_custom_call.1} parent=58 // loop_exit
                  _
              $region59: #{tpu_custom_call.1} parent=43 // pred_fallthru
                _
            $region44: #{tpu_custom_call.1} parent=39 // pred_fallthru
              _
            // Predicated region
            $region45: #{tpu_custom_call.1} parent=39 // pred_check
              _
            $region46: #{tpu_custom_call.1} parent=39 // pred_check_branch
              %304 = sbr.rel (0) target = $region48
            $region47: #{tpu_custom_call.1} parent=39 // pred_region
              loop: start=0, step=1, limit=1
              $region49: #{tpu_custom_call.1} parent=47 // loop_pre_header
                _
              $region50: #{tpu_custom_call.1} parent=47 // loop_header
                %s307 = sphi 0, %s311
                %p308 = scmp.ge.s32.totalorder %s307, 1
                %s312 = sphi %s298, %s298
                %s313 = sphi %s294, %s294
              $region51: #{tpu_custom_call.1} parent=47 // loop_header_branch
                %310 = sbr.rel (%p308) target = $region55
              $region52: #{tpu_custom_call.1} parent=47 // loop_body
                %v314 = vld [vmem:[%s312] sm:$0xf]
                %315 = vst [vmem:[%s313] sm:$0xf] %v314
                %v316 = vld [vmem:[%s312 + $0x8] sm:$0xf]
                %317 = vst [vmem:[%s313 + $0x4] sm:$0xf] %v316
                %v318 = vld [vmem:[%s312 + $0x10] sm:$0xf]
                %319 = vst [vmem:[%s313 + $0x8] sm:$0xf] %v318
                %v320 = vld [vmem:[%s312 + $0x18] sm:$0xf]
                %321 = vst [vmem:[%s313 + $0xc] sm:$0xf] %v320
              $region53: #{tpu_custom_call.1} parent=47 // loop_footer
                %s311 = sadd.s32 1, %s307
              $region54: #{tpu_custom_call.1} parent=47 // loop_footer_branch
                %306 = sbr.rel target = $region50
              $region55: #{tpu_custom_call.1} parent=47 // loop_exit
                _
            $region48: #{tpu_custom_call.1} parent=39 // pred_fallthru
              _
          $region40: #{tpu_custom_call.1} parent=35 // pred_fallthru
            _
          %349 = vnop
        $region36: #{tpu_custom_call.1} parent=31 // pred_fallthru
          _
        // Predicated region
        $region74: #{tpu_custom_call.1} parent=31 // pred_check
          %p350 = pneg %p167
        $region75: #{tpu_custom_call.1} parent=31 // pred_check_branch
          %352 = sbr.rel (%p350) target = $region77
        $region76: #{tpu_custom_call.1} parent=31 // pred_region
          %p353 = scmp.lt.s32.totalorder %s28, 1
          %s354 = scalar_select %p353, %s28, 1
          %p355 = scmp.lt.s32.totalorder %s29, 1
          %s356 = scalar_select %p355, %s29, 1
          %s357 = smul.addr %s354, 2
          %s358 = sadd.s32 %s356, %s357
          %s359 = smul.addr %s358, 2
          %s360 = scalar_lea.vmem %s5, %s359
        $region77: #{tpu_custom_call.1} parent=31 // pred_fallthru
          _
      $region32: #{tpu_custom_call.1} parent=5 // pred_fallthru
        _
      %p361 = scmp.le.s32.totalorder 1, %s21
      %p362 = scmp.lt.s32.totalorder %s21, 5
      %p363 = pnand %p361, %p362
      %p364 = pneg %p363
      // Predicated region
      $region78: #{tpu_custom_call.1} parent=5 // pred_check
        _
      $region79: #{tpu_custom_call.1} parent=5 // pred_check_branch
        %366 = sbr.rel (%p363) target = $region81
      $region80: #{tpu_custom_call.1} parent=5 // pred_region
        %s367 = ssub.s32 %s21, 1
        %s368 = sand.u32 %s48, 1
        %s369 = sand.u32 %s48, 1
        %s370 = smul.addr %s369, 16
        %s371 = scalar_lea.vmem [#allocation2], %s370
        // Predicated region
        $region82: #{tpu_custom_call.1} parent=80 // pred_check
          %p372 = pneg %p61
        $region83: #{tpu_custom_call.1} parent=80 // pred_check_branch
          %374 = sbr.rel (%p372) target = $region85
        $region84: #{tpu_custom_call.1} parent=80 // pred_region
          _
        $region85: #{tpu_custom_call.1} parent=80 // pred_fallthru
          _
        %s375 = sand.u32 %s48, 1
        %s376 = sand.u32 %s48, 1
        %s377 = smul.addr %s376, 16
        %s378 = scalar_lea.vmem [#allocation2], %s377
        %p379 = pneg %p61
        %p380 = pneg %p58
        %p381 = pneg %p82
        %p382 = pneg %p79
        %p383 = pneg %p103
        %p384 = pneg %p100
        %p385 = pneg %p124
        %p386 = pneg %p121
        %p387 = pneg %p145
        %p388 = pneg %p142
        %p389 = scmp.lt.s32.totalorder %s30, 1
        %s390 = scalar_select %p389, %s30, 1
        %p391 = scmp.lt.s32.totalorder %s31, 1
        %s392 = scalar_select %p391, %s31, 1
        %s393 = smul.addr %s390, 2
        %s394 = sadd.s32 %s392, %s393
        %s395 = smul.addr %s394, 2
        %s396 = scalar_lea.vmem %s5, %s395
        %p397 = pneg %p173
        %p398 = pneg %p170
        %p399 = pneg %p201
        %p400 = pneg %p198
        %s401 = sand.u32 %s188, 1
        %s402 = scalar_lea.sflag [#allocation4], %s401
        %s403 = sand.u32 %s188, 1
        %s404 = smul.addr %s403, 4
        %s405 = scalar_lea.vmem [#allocation3], %s404
        %p406 = pneg %p229
        %p407 = pneg %p226
        %s408 = sand.u32 %s26, 1
        %s409 = scalar_lea.sflag [#allocation6], %s408
        %s410 = sand.u32 %s216, 1
        %s411 = smul.addr %s410, 4
        %s412 = scalar_lea.vmem [#allocation5], %s411
        %p413 = pneg %p257
        %p414 = pneg %p254
        %s415 = sand.u32 %s26, 1
        %s416 = scalar_lea.sflag [#allocation6], %s415
        %s417 = sand.u32 %s244, 1
        %s418 = scalar_lea.vmem [#allocation7], %s417
        %p419 = scmp.lt.s32.totalorder %s30, 1
        %s420 = scalar_select %p419, %s30, 1
        %p421 = scmp.lt.s32.totalorder %s31, 1
        %s422 = scalar_select %p421, %s31, 1
        %s423 = smul.addr %s420, 2
        %s424 = sadd.s32 %s422, %s423
        %s425 = smul.addr %s424, 2
        %s426 = scalar_lea.vmem %s5, %s425
        %v428 = vld [vmem:[%s1] sm:$0xf]
        %v429 = vld [vmem:[%s1 + $0x4] sm:$0xf]
        %v430 = vld [vmem:[%s1 + $0x8] sm:$0xf]
        %v431 = vld [vmem:[%s1 + $0xc] sm:$0xf]
        %v432 = vld [vmem:[%s371] sm:$0xf]
        %v433 = vld [vmem:[%s371 + $0x4] sm:$0xf]
        %v434 = vld [vmem:[%s371 + $0x8] sm:$0xf]
        %v435 = vld [vmem:[%s371 + $0xc] sm:$0x3]
        %v436 = vld [vmem:[%s2] sm:$0xff]
        %v437 = vld [vmem:[%s2 + $0x8] sm:$0xff]
        %v438 = vld [vmem:[%s2 + $0x10] sm:$0xff]
        %v439 = vld [vmem:[%s2 + $0x18] sm:$0xff]
        %441 = vset.pattern.permute.xlu0 0
        %442 = vperm.xlu0 %441, %v436
        %v443 = vpop.permute.xlu0 %442
        %446 = vset.pattern.permute.xlu0 0
        %447 = vperm.xlu0 %446, %v437
        %v448 = vpop.permute.xlu0 %447
        %451 = vset.pattern.permute.xlu0 0
        %452 = vperm.xlu0 %451, %v438
        %v453 = vpop.permute.xlu0 %452
        %456 = vset.pattern.permute.xlu0 0
        %457 = vperm.xlu0 %456, %v439
        %v458 = vpop.permute.xlu0 %457
        %v464 = vunpack.c.l.b16 %v428
        %v465 = vunpack.c.l.b16 %v429
        %v466 = vunpack.c.l.b16 %v430
        %v467 = vunpack.c.l.b16 %v431
        %v468 = vpack.c.b16 %v465, %v464
        %v469 = vpack.c.b16 %v467, %v466
        %v474 = vunpack.c.l.b16 %v432
        %v475 = vunpack.c.l.b16 %v433
        %v476 = vunpack.c.l.b16 %v434
        %v477 = vunpack.c.l.b16 %v435
        %v478 = vpack.c.b16 %v475, %v474
        %v479 = vpack.c.b16 %v477, %v476
        %vm481 = vcmask 220160
        %v483 = vsel %vm481, %v468, 0
        %v486 = vsel %vm481, %v469, 0
        %vm488 = vcmask 1044480
        %vm489 = vcmask 1045504
        %v490 = vsel %vm488, 4294967295, 65535
        %v491 = vsel %vm489, %v490, 0
        %v493 = vand.u32 %v479, %v491
        %495 = vmatprep.subr.bf16.mxu0 0
        %496 = vmatpush1.bf16.msra.mxu0 %v478
        %497 = vmatprep.subr.bf16.mxu0 0
        %498 = vmatpush1.bf16.msra.mxu0 %v493
        %499 = vmatprep.subr.bf16.mxu0 0
        %500 = vmatpush1.bf16.msra.mxu0 0
        %501 = vmatprep.subr.bf16.mxu0 0
        %502 = vmatpush1.bf16.msra.mxu0 0
        %503 = vmatprep.subr.bf16.mxu0 0
        %504 = vmatpush1.bf16.msra.mxu0 0
        %505 = vmatprep.subr.bf16.mxu0 0
        %506 = vmatpush1.bf16.msra.mxu0 0
        %507 = vmatprep.subr.bf16.mxu0 0
        %508 = vmatpush1.bf16.msra.mxu0 0
        %509 = vmatprep.subr.bf16.mxu0 0
        %510 = vmatpush1.bf16.msra.mxu0 0
        %511 = vmatprep.subr.bf16.mxu0 0
        %512 = vmatpush1.bf16.msra.mxu0 0
        %513 = vmatprep.subr.bf16.mxu0 0
        %514 = vmatpush1.bf16.msra.mxu0 0
        %515 = vmatprep.subr.bf16.mxu0 0
        %516 = vmatpush1.bf16.msra.mxu0 0
        %517 = vmatprep.subr.bf16.mxu0 0
        %518 = vmatpush1.bf16.msra.mxu0 0
        %519 = vmatprep.subr.bf16.mxu0 0
        %520 = vmatpush1.bf16.msra.mxu0 0
        %521 = vmatprep.subr.bf16.mxu0 0
        %522 = vmatpush1.bf16.msra.mxu0 0
        %523 = vmatprep.subr.bf16.mxu0 0
        %524 = vmatpush1.bf16.msra.mxu0 0
        %525 = vmatprep.subr.bf16.mxu0 0
        %526 = vmatpush1.bf16.msra.mxu0 0
        %527 = vmatprep.mubr.bf16.mxu0 0
        %528 = vmatmul.mubr.bf16.gmra.mrb[0].mxu0 %v483
        %v529 = vpop.f32.mrb[0].mxu0
        %v530 = vadd.f32 %v443, %v529
        %v531 = vpop.f32.mrb[0].mxu0
        %v532 = vpop.f32.mrb[0].mxu0
        %v533 = vadd.f32 %v448, %v532
        %v534 = vpop.f32.mrb[0].mxu0
        %535 = vmatprep.mubr.bf16.mxu0 0
        %536 = vmatmul.mubr.bf16.gmra.mrb[0].mxu0 %v486
        %v537 = vpop.f32.mrb[0].mxu0
        %v538 = vadd.f32 %v453, %v537
        %v539 = vpop.f32.mrb[0].mxu0
        %v540 = vpop.f32.mrb[0].mxu0
        %v541 = vadd.f32 %v458, %v540
        %v542 = vpop.f32.mrb[0].mxu0
        %543 = vdwg.mxu0
        %v544 = vmax.f32 %v530, 0.0
        %v545 = vmax.f32 %v533, 0.0
        %v546 = vmax.f32 %v538, 0.0
        %v547 = vmax.f32 %v541, 0.0
        %v548 = vld [vmem:[%s3] sm:$0xf]
        %v549 = vpack.c.bf16 %v545, %v544
        %v550 = vpack.c.bf16 %v547, %v546
        %v551 = vld [vmem:[%s4] sm:$0xff]
        %553 = vset.pattern.permute.xlu0 0
        %554 = vperm.xlu0 %553, %v551
        %v555 = vpop.permute.xlu0 %554
        %vm557 = vcmask 261120
        %v559 = vsel %vm557, %v548, 0
        %561 = vmatprep.subr.bf16.mxu0 0
        %562 = vmatpush1.bf16.msra.mxu0 %v549
        %563 = vmatprep.subr.bf16.mxu0 0
        %564 = vmatpush1.bf16.msra.mxu0 %v550
        %565 = vmatprep.subr.bf16.mxu0 0
        %566 = vmatpush1.bf16.msra.mxu0 0
        %567 = vmatprep.subr.bf16.mxu0 0
        %568 = vmatpush1.bf16.msra.mxu0 0
        %569 = vmatprep.subr.bf16.mxu0 0
        %570 = vmatpush1.bf16.msra.mxu0 0
        %571 = vmatprep.subr.bf16.mxu0 0
        %572 = vmatpush1.bf16.msra.mxu0 0
        %573 = vmatprep.subr.bf16.mxu0 0
        %574 = vmatpush1.bf16.msra.mxu0 0
        %575 = vmatprep.subr.bf16.mxu0 0
        %576 = vmatpush1.bf16.msra.mxu0 0
        %577 = vmatprep.subr.bf16.mxu0 0
        %578 = vmatpush1.bf16.msra.mxu0 0
        %579 = vmatprep.subr.bf16.mxu0 0
        %580 = vmatpush1.bf16.msra.mxu0 0
        %581 = vmatprep.subr.bf16.mxu0 0
        %582 = vmatpush1.bf16.msra.mxu0 0
        %583 = vmatprep.subr.bf16.mxu0 0
        %584 = vmatpush1.bf16.msra.mxu0 0
        %585 = vmatprep.subr.bf16.mxu0 0
        %586 = vmatpush1.bf16.msra.mxu0 0
        %587 = vmatprep.subr.bf16.mxu0 0
        %588 = vmatpush1.bf16.msra.mxu0 0
        %589 = vmatprep.subr.bf16.mxu0 0
        %590 = vmatpush1.bf16.msra.mxu0 0
        %591 = vmatprep.subr.bf16.mxu0 0
        %592 = vmatpush1.bf16.msra.mxu0 0
        %593 = vmatprep.mubr.bf16.mxu0 0
        %594 = vmatmul.mubr.bf16.gmra.mrb[0].mxu0 %v559
        %v595 = vpop.f32.mrb[0].mxu0
        %v596 = vadd.f32 %v555, %v595
        %v597 = vpop.f32.mrb[0].mxu0
        %v598 = vpop.f32.mrb[0].mxu0
        %v599 = vpop.f32.mrb[0].mxu0
        %600 = vdwg.mxu0
        %601 = vst [vmem:[%s405] sm:$0xf] %v596
        %602 = vst [vmem:[%s412 - $0x4] sm:$0xf0] %v596
        %v603 = vld [vmem:[%s426] sm:$0x3]
        %v604 = vunpack.c.l.bf16 %v603
        %v605 = vand.u32 2147483647, %v596
        %v606 = vsub.f32 0.0, %v605
        %v607 = vmul.f32 %v606, 1.442695
        %v608 = vpow.pop %v607
        %v609 = vmin.f32 %v596, 0.0
        %v610 = vadd.f32 %v608, 1.0
        %v611 = vlog2.pop %v610
        %v612 = vmul.f32 %v611, 0.6931472
        %v613 = vmul.f32 -0.5, %v608
        %v614 = vadd.f32 %v613, 1.0
        %v615 = vmul.f32 %v614, %v608
        %v616 = vand.u32 2147483647, %v608
        %vm617 = vcmp.lt.f32.partialorder %v616, 0.0004427343
        %v618 = vsel %vm617, %v615, %v612
        %v619 = vsub.f32 %v609, %v618
        %vm620 = vcmp.ge.f32.partialorder %v596, 0.0
        %v621 = vsel %vm620, 1.0, %v608
        %v622 = vadd.f32 %v608, 1.0
        %v623 = vrcp.pop %v622
        %v624 = vmul.f32 %v621, %v623
        %v625 = vmax.f32 %v624, 0.0001
        %v626 = vmin.f32 %v625, 0.9999
        %v627 = vmax.f32 %v619, -9.2103405
        %v628 = vmin.f32 %v627, -0.000100005
        %v629 = vsub.f32 %v619, %v596
        %v630 = vmax.f32 %v629, -9.2103405
        %v631 = vmin.f32 %v630, -0.000100005
        %vm632 = vcmp.eq.f32.partialorder %v604, 1.0
        %v633 = vsel %vm632, 1, 0
        %v634 = vcvt.s32.f32 %v633
        %vm635 = vcmp.lt.f32.partialorder %v604, 1.0
        %v636 = vsel %vm635, 1, 0
        %v637 = vcvt.s32.f32 %v636
        %v638 = vsub.f32 1.0, %v604
        %v639 = vmul.f32 %v638, %v638
        %v640 = vmul.f32 %v639, %v639
        %v641 = vsub.f32 1.0, %v626
        %v642 = vmul.f32 %v641, %v641
        %v643 = vmul.f32 %v628, %v642
        %v644 = vmul.f32 %v643, %v634
        %vm645 = vcmask 1043456
        %v646 = vsel %vm645, %v644, 0.0
        %647 = vadd.xlane.f32.xlu0 %v646
        %v648 = vpop.xlane.xlu0 %647
        %v649 = vrot.slane %v648, 4
        %v650 = vadd.f32 %v648, %v649
        %v651 = vrot.slane %v650, 2
        %v652 = vadd.f32 %v650, %v651
        %v653 = vrot.slane %v652, 1
        %v654 = vadd.f32 %v652, %v653
        %s655 = vtos %v654
        %v656 = vmul.f32 %v631, %v626
        %v657 = vmul.f32 %v656, %v626
        %v658 = vmul.f32 %v657, %v640
        %v659 = vmul.f32 %v658, %v637
        %v660 = vsel %vm645, %v659, 0.0
        %661 = vadd.xlane.f32.xlu0 %v660
        %v662 = vpop.xlane.xlu0 %661
        %v663 = vrot.slane %v662, 4
        %v664 = vadd.f32 %v662, %v663
        %v665 = vrot.slane %v664, 2
        %v666 = vadd.f32 %v664, %v665
        %v667 = vrot.slane %v666, 1
        %v668 = vadd.f32 %v666, %v667
        %s669 = vtos %v668
        %v670 = vsel %vm645, %v634, 0.0
        %671 = vadd.xlane.f32.xlu0 %v670
        %v672 = vpop.xlane.xlu0 %671
        %v673 = vrot.slane %v672, 4
        %v674 = vadd.f32 %v672, %v673
        %v675 = vrot.slane %v674, 2
        %v676 = vadd.f32 %v674, %v675
        %v677 = vrot.slane %v676, 1
        %v678 = vadd.f32 %v676, %v677
        %s679 = vtos %v678
        %v680 = vlaneseq
        %v681 = vand.u32 %v680, 127
        %vm682 = vcmp.eq.s32.totalorder %v681, 0
        %v683 = vstv %s655
        %v684 = vsel %vm682, %v683, 0.0
        %vm685 = vcmp.eq.s32.totalorder %v681, 1
        %v686 = vstv %s669
        %v687 = vsel %vm685, %v686, 0.0
        %v688 = vadd.f32 %v684, %v687
        %vm689 = vcmp.eq.s32.totalorder %v681, 2
        %v690 = vstv %s679
        %v691 = vsel %vm689, %v690, 0.0
        %v692 = vadd.f32 %v688, %v691
        %vm693 = vcmask 24576
        %694 = vst.msk [vmem:[%s418] sm:$0x1] %vm693, %v692
        %s695 = sand.u32 %s188, 1
        %s696 = scalar_lea.sflag [#allocation4], %s695
        %s697 = sand.u32 %s188, 1
        %s698 = smul.addr %s697, 4
        %s699 = scalar_lea.vmem [#allocation3], %s698
        %s700 = sand.u32 %s26, 1
        %s701 = scalar_lea.sflag [#allocation6], %s700
        %s702 = sand.u32 %s216, 1
        %s703 = smul.addr %s702, 4
        %s704 = scalar_lea.vmem [#allocation5], %s703
        %s705 = sand.u32 %s26, 1
        %s706 = scalar_lea.sflag [#allocation6], %s705
        %s707 = sand.u32 %s244, 1
        %s708 = scalar_lea.vmem [#allocation7], %s707
        // Predicated region
        $region86: #{tpu_custom_call.1} parent=80 // pred_check
          %p709 = pneg %p198
        $region87: #{tpu_custom_call.1} parent=80 // pred_check_branch
          %711 = sbr.rel (%p709) target = $region89
        $region88: #{tpu_custom_call.1} parent=80 // pred_region
          %s713 = ssub.s32 64, 64
          %714 = vsyncadd %s696, %s713
          %s715 = smul.addr %s30, 2
          %s716 = sadd.s32 %s31, %s715
          %s717 = smul.addr %s716, 64
          %s718 = scalar_lea.hbm %s6, %s717
          %s720 = sshll.u32 %s699, 4
          %s721 = int_to_ptr.vmem [resolvable:$true] %s720
          %723 = dma.vmem_to_hbm [thread:$0]  %s721, 64, %s718, %s696
        $region89: #{tpu_custom_call.1} parent=80 // pred_fallthru
          _
        // Predicated region
        $region90: #{tpu_custom_call.1} parent=80 // pred_check
          %p724 = pneg %p226
        $region91: #{tpu_custom_call.1} parent=80 // pred_check_branch
          %726 = sbr.rel (%p724) target = $region93
        $region92: #{tpu_custom_call.1} parent=80 // pred_region
          %s728 = ssub.s32 64, 64
          %729 = vsyncadd %s701, %s728
          %s730 = smul.addr %s30, 2
          %s731 = sadd.s32 %s31, %s730
          %s732 = smul.addr %s731, 64
          %s733 = scalar_lea.hbm %s7, %s732
          %s735 = sshll.u32 %s704, 4
          %s736 = int_to_ptr.vmem [resolvable:$true] %s735
          %738 = dma.vmem_to_hbm [thread:$0]  %s736, 64, %s733, %s701
        $region93: #{tpu_custom_call.1} parent=80 // pred_fallthru
          _
        // Predicated region
        $region94: #{tpu_custom_call.1} parent=80 // pred_check
          %p739 = pneg %p254
        $region95: #{tpu_custom_call.1} parent=80 // pred_check_branch
          %741 = sbr.rel (%p739) target = $region97
        $region96: #{tpu_custom_call.1} parent=80 // pred_region
          %s743 = ssub.s32 16, 16
          %744 = vsyncadd %s706, %s743
          %s745 = smul.addr %s30, 2
          %s746 = sadd.s32 %s31, %s745
          %s747 = smul.addr %s746, 16
          %s748 = scalar_lea.hbm %s8, %s747
          %s750 = sshll.u32 %s708, 4
          %s751 = int_to_ptr.vmem [resolvable:$true] %s750
          %753 = dma.vmem_to_hbm [thread:$0]  %s751, 16, %s748, %s706
        $region97: #{tpu_custom_call.1} parent=80 // pred_fallthru
          _
      $region81: #{tpu_custom_call.1} parent=5 // pred_fallthru
        _
      %p754 = scmp.le.s32.totalorder 2, %s21
      // Predicated region
      $region98: #{tpu_custom_call.1} parent=5 // pred_check
        %p755 = pneg %p754
      $region99: #{tpu_custom_call.1} parent=5 // pred_check_branch
        %757 = sbr.rel (%p755) target = $region101
      $region100: #{tpu_custom_call.1} parent=5 // pred_region
        %s758 = ssub.s32 %s21, 2
        // Predicated region
        $region102: #{tpu_custom_call.1} parent=100 // pred_check
          %p759 = pneg %p204
        $region103: #{tpu_custom_call.1} parent=100 // pred_check_branch
          %761 = sbr.rel (%p759) target = $region105
        $region104: #{tpu_custom_call.1} parent=100 // pred_region
          %s762 = sand.u32 %s189, 1
          %s763 = scalar_lea.sflag [#allocation4], %s762
          %s764 = sand.u32 %s189, 1
          %s765 = smul.addr %s764, 4
          %s766 = scalar_lea.vmem [#allocation3], %s765
          %767 = dma.done %s763, 64
        $region105: #{tpu_custom_call.1} parent=100 // pred_fallthru
          _
        // Predicated region
        $region106: #{tpu_custom_call.1} parent=100 // pred_check
          %p768 = pneg %p232
        $region107: #{tpu_custom_call.1} parent=100 // pred_check_branch
          %770 = sbr.rel (%p768) target = $region109
        $region108: #{tpu_custom_call.1} parent=100 // pred_region
          %s771 = sand.u32 %s27, 1
          %s772 = scalar_lea.sflag [#allocation6], %s771
          %s773 = sand.u32 %s217, 1
          %s774 = smul.addr %s773, 4
          %s775 = scalar_lea.vmem [#allocation5], %s774
          %776 = dma.done %s772, 64
        $region109: #{tpu_custom_call.1} parent=100 // pred_fallthru
          _
        // Predicated region
        $region110: #{tpu_custom_call.1} parent=100 // pred_check
          %p777 = pneg %p260
        $region111: #{tpu_custom_call.1} parent=100 // pred_check_branch
          %779 = sbr.rel (%p777) target = $region113
        $region112: #{tpu_custom_call.1} parent=100 // pred_region
          %s780 = sand.u32 %s27, 1
          %s781 = scalar_lea.sflag [#allocation6], %s780
          %s782 = sand.u32 %s245, 1
          %s783 = scalar_lea.vmem [#allocation7], %s782
          %784 = dma.done %s781, 16
        $region113: #{tpu_custom_call.1} parent=100 // pred_fallthru
          _
      $region101: #{tpu_custom_call.1} parent=5 // pred_fallthru
        _
    $region6: #{tpu_custom_call.1} parent=1 // loop_footer
      %s25 = sadd.s32 1, %s21
    $region7: #{tpu_custom_call.1} parent=1 // loop_footer_branch
      %20 = sbr.rel target = $region3
    $region8: #{tpu_custom_call.1} parent=1 // loop_exit
      _
    %785 = vsyncpa [#allocation4], 1
    %s786 = scalar_lea.sflag [#allocation4], 1
    %787 = vsyncpa %s786, 1
    %788 = vsyncpa [#allocation6], 1
    %s789 = scalar_lea.sflag [#allocation6], 1
    %790 = vsyncpa %s789, 1

</llo_original>
